<compile_context>
chip_gen: v6e
topology: v6e:2x2x1
jax: 0.10.0
libtpu: 0.0.40
codegen_flags: <defaults>
</compile_context>

<pallas_src>
import jax
import jax.numpy as jnp
from jax.experimental import pallas as pl
from jax.experimental.pallas import tpu as pltpu

LANE = 128        # f32 lane width
SUBLANE = 8       # f32 sublane granularity
MAX_TILE_B = 1024 # big batch tiles amortize the ~0.35us per-grid-step overhead
                  # (double-buffered VMEM at 1024 rows is only ~tens of KiB)


def _round_up(x: int, m: int) -> int:
    return ((x + m - 1) // m) * m


def mlp_kernel(x_ref, w1_ref, b1_ref, w2_ref, b2_ref, o_ref):
    # fc1: (tile_b, in) @ (in, H_PAD) + (1, H_PAD), then ReLU.
    # Hidden is lane-dense (128) so bias-add / ReLU are full-vreg VPU ops.
    h = jnp.dot(x_ref[...], w1_ref[...], preferred_element_type=jnp.float32)
    h = jnp.maximum(h + b1_ref[...], 0.0)
    # fc2: (tile_b, H_PAD) @ (H_PAD, out) + (1, out). Output kept at its real
    # width (masked stores are cheap; the store slot is nowhere near saturated).
    q = jnp.dot(h, w2_ref[...], preferred_element_type=jnp.float32)
    o_ref[...] = (q + b2_ref[...]).astype(o_ref.dtype)


def prepare_params(w1, b1, w2, b2):
    """One-time param prep (hoisted out of the hot path).

    w1: (input_size, hidden)  -- transposed PyTorch fc1.weight
    b1: (hidden,)             -- fc1.bias
    w2: (hidden, output_size) -- transposed PyTorch fc2.weight
    b2: (output_size,)        -- fc2.bias

    Pads the hidden dim to 128 lanes with zeros (zero rows/cols + ReLU(0)=0
    keep the padded lanes inert, so results are exact).
    """
    w1 = jnp.asarray(w1, jnp.float32)
    w2 = jnp.asarray(w2, jnp.float32)
    b1 = jnp.reshape(jnp.asarray(b1, jnp.float32), (1, -1))
    b2 = jnp.reshape(jnp.asarray(b2, jnp.float32), (1, -1))

    hidden = w1.shape[1]
    h_pad = _round_up(hidden, LANE)
    w1p = jnp.pad(w1, ((0, 0), (0, h_pad - hidden)))
    b1p = jnp.pad(b1, ((0, 0), (0, h_pad - hidden)))
    w2p = jnp.pad(w2, ((0, h_pad - hidden), (0, 0)))
    return w1p, b1p, w2p, b2


def _choose_tile_b(B: int) -> int:
    b8 = _round_up(B, SUBLANE)
    if b8 <= 2 * SUBLANE:
        # Tiny batch: a single grid step; splitting across TCs isn't worth it.
        return b8
    if b8 <= 2 * MAX_TILE_B:
        # Aim for >= 2 grid steps so v7x's two TensorCores can split the
        # "parallel" batch axis (harmless on single-TC v5e/v6e).
        return _round_up((b8 + 1) // 2, SUBLANE)
    return MAX_TILE_B


@jax.jit
def network_forward(state, w1p, b1p, w2p, b2):
    """Pallas forward: relu(state @ w1 + b1) @ w2 + b2.

    state: (B, input_size) f32
    w1p, b1p, w2p, b2: outputs of prepare_params (hidden padded to 128).
    returns: (B, output_size) f32
    """
    state = jnp.asarray(state, jnp.float32)
    B, in_size = state.shape
    h_pad = w1p.shape[1]
    out_size = w2p.shape[1]

    tile_b = _choose_tile_b(B)
    grid = (pl.cdiv(B, tile_b),)

    return pl.pallas_call(
        mlp_kernel,
        out_shape=jax.ShapeDtypeStruct((B, out_size), jnp.float32),
        grid=grid,
        in_specs=[
            # Activations: tiled over the batch grid axis (ragged last block
            # is masked on store; garbage rows never feed valid rows).
            pl.BlockSpec((tile_b, in_size), lambda i: (i, 0)),
            # Weights / biases: one full block revisited every step -> stay
            # VMEM-resident across the grid (no re-DMA).
            pl.BlockSpec((in_size, h_pad), lambda i: (0, 0)),
            pl.BlockSpec((1, h_pad), lambda i: (0, 0)),
            pl.BlockSpec((h_pad, out_size), lambda i: (0, 0)),
            pl.BlockSpec((1, out_size), lambda i: (0, 0)),
        ],
        out_specs=pl.BlockSpec((tile_b, out_size), lambda i: (i, 0)),
        compiler_params=pltpu.CompilerParams(
            dimension_semantics=("parallel",),  # batch axis splittable on v7x
        ),
    )(state, w1p, b1p, w2p, b2)


def init_params(key, input_size, output_size, hidden=50):
    """Deterministic init mimicking PyTorch nn.Linear (uniform +-1/sqrt(fan_in))."""
    k1, k2, k3, k4 = jax.random.split(key, 4)
    bound1 = 1.0 / jnp.sqrt(jnp.float32(input_size))
    bound2 = 1.0 / jnp.sqrt(jnp.float32(hidden))
    w1 = jax.random.uniform(k1, (input_size, hidden), jnp.float32, -bound1, bound1)
    b1 = jax.random.uniform(k2, (hidden,), jnp.float32, -bound1, bound1)
    w2 = jax.random.uniform(k3, (hidden, output_size), jnp.float32, -bound2, bound2)
    b2 = jax.random.uniform(k4, (output_size,), jnp.float32, -bound2, bound2)
    return w1, b1, w2, b2


if __name__ == "__main__":
    # TODO(synk): at deployment batch sizes this small the pallas_call dispatch
    # dominates; batch many env states per call for real RL inner-loop use.
    input_size = 4     # e.g. sensor state dims
    output_size = 3    # e.g. number of actions (q-values)
    batch = 2

    key = jax.random.PRNGKey(0)
    kx, kp = jax.random.split(key)
    state = jax.random.normal(kx, (batch, input_size), jnp.float32)
    w1, b1, w2, b2 = init_params(kp, input_size, output_size)

    # One-time param prep (hoisted out of the per-call path).
    w1p, b1p, w2p, b2p = prepare_params(w1, b1, w2, b2)

    q_values = network_forward(state, w1p, b1p, w2p, b2p)
    q_values = jax.block_until_ready(q_values)

    # Reference check in plain JAX.
    q_ref = jnp.maximum(state @ w1 + b1[None, :], 0.0) @ w2 + b2[None, :]
    assert q_values.shape == (batch, output_size)
    assert jnp.allclose(q_values, q_ref, atol=1e-5, rtol=1e-5)

    # Larger batch: exercises grid > 1 and the ragged last block (600 -> 2x304).
    big_state = jax.random.normal(kx, (600, input_size), jnp.float32)
    q_big = jax.block_until_ready(network_forward(big_state, w1p, b1p, w2p, b2p))
    q_big_ref = jnp.maximum(big_state @ w1 + b1[None, :], 0.0) @ w2 + b2[None, :]
    assert q_big.shape == (600, output_size)
    assert jnp.allclose(q_big, q_big_ref, atol=1e-4, rtol=1e-4)

    # Non-multiple-of-8 batch to hit the masked-writeback path explicitly.
    odd_state = jax.random.normal(kx, (37, input_size), jnp.float32)
    q_odd = jax.block_until_ready(network_forward(odd_state, w1p, b1p, w2p, b2p))
    q_odd_ref = jnp.maximum(odd_state @ w1 + b1[None, :], 0.0) @ w2 + b2[None, :]
    assert q_odd.shape == (37, output_size)
    assert jnp.allclose(q_odd, q_odd_ref, atol=1e-5, rtol=1e-5)

    print("KERNEL_OK")
</pallas_src>

<mosaic_0001>
module attributes {stable_mosaic.version = 11 : i64} {
  func.func @mlp_kernel(%arg0: i32, %arg1: memref<8x4xf32, #tpu.memory_space<vmem>>, %arg2: memref<4x128xf32, #tpu.memory_space<vmem>>, %arg3: memref<1x128xf32, #tpu.memory_space<vmem>>, %arg4: memref<128x3xf32, #tpu.memory_space<vmem>>, %arg5: memref<1x3xf32, #tpu.memory_space<vmem>>, %arg6: memref<8x3xf32, #tpu.memory_space<vmem>>) attributes {dimension_semantics = [#tpu.dimension_semantics<parallel>], iteration_bounds = array<i64: 1>, scalar_prefetch = 0 : i64, scratch_operands = 0 : i64, tpu.core_type = #tpu.core_type<tc>, window_params = [{transform_indices = @transform_0, window_bounds = array<i64: 8, 4>}, {pipeline_mode = #tpu.pipeline_mode<synchronous>, transform_indices = @transform_1, window_bounds = array<i64: 4, 128>}, {pipeline_mode = #tpu.pipeline_mode<synchronous>, transform_indices = @transform_2, window_bounds = array<i64: 1, 128>}, {pipeline_mode = #tpu.pipeline_mode<synchronous>, transform_indices = @transform_3, window_bounds = array<i64: 128, 3>}, {pipeline_mode = #tpu.pipeline_mode<synchronous>, transform_indices = @transform_4, window_bounds = array<i64: 1, 3>}, {transform_indices = @transform_5, window_bounds = array<i64: 8, 3>}]} {
    %c0 = arith.constant 0 : index
    %c0_0 = arith.constant 0 : index
    %0 = vector.load %arg1[%c0, %c0_0] : memref<8x4xf32, #tpu.memory_space<vmem>>, vector<8x4xf32>
    %c0_1 = arith.constant 0 : index
    %c0_2 = arith.constant 0 : index
    %1 = vector.load %arg2[%c0_1, %c0_2] : memref<4x128xf32, #tpu.memory_space<vmem>>, vector<4x128xf32>
    %cst = arith.constant dense<0.000000e+00> : vector<8x128xf32>
    %2 = tpu.matmul %0, %1, %cst {dimension_numbers = #tpu.dot_dimension_numbers<[1], [0], [0], [1], [0, 0, 1, 1], [], []>} : vector<8x4xf32>, vector<4x128xf32>, vector<8x128xf32> -> vector<8x128xf32>
    %c0_3 = arith.constant 0 : index
    %c0_4 = arith.constant 0 : index
    %3 = vector.load %arg3[%c0_3, %c0_4] : memref<1x128xf32, #tpu.memory_space<vmem>>, vector<1x128xf32>
    %4 = vector.broadcast %3 : vector<1x128xf32> to vector<8x128xf32>
    %5 = arith.addf %2, %4 : vector<8x128xf32>
    %cst_5 = arith.constant 0.000000e+00 : f32
    %6 = vector.broadcast %cst_5 : f32 to vector<8x128xf32>
    %7 = arith.maximumf %5, %6 : vector<8x128xf32>
    %c0_6 = arith.constant 0 : index
    %c0_7 = arith.constant 0 : index
    %8 = vector.load %arg4[%c0_6, %c0_7] : memref<128x3xf32, #tpu.memory_space<vmem>>, vector<128x3xf32>
    %cst_8 = arith.constant dense<0.000000e+00> : vector<8x3xf32>
    %9 = tpu.matmul %7, %8, %cst_8 {dimension_numbers = #tpu.dot_dimension_numbers<[1], [0], [0], [1], [0, 0, 1, 1], [], []>} : vector<8x128xf32>, vector<128x3xf32>, vector<8x3xf32> -> vector<8x3xf32>
    %c0_9 = arith.constant 0 : index
    %c0_10 = arith.constant 0 : index
    %10 = vector.load %arg5[%c0_9, %c0_10] : memref<1x3xf32, #tpu.memory_space<vmem>>, vector<1x3xf32>
    %11 = vector.broadcast %10 : vector<1x3xf32> to vector<8x3xf32>
    %12 = arith.addf %9, %11 : vector<8x3xf32>
    %c0_11 = arith.constant 0 : index
    %c0_12 = arith.constant 0 : index
    %13 = vector.load %arg6[%c0_11, %c0_12] : memref<8x3xf32, #tpu.memory_space<vmem>>, vector<8x3xf32>
    tpu.vector_store %arg6[%c0_11, %c0_12], %12 {strides = array<i32>} : memref<8x3xf32, #tpu.memory_space<vmem>>, vector<8x3xf32>,
    return
  }
  func.func @transform_0(%arg0: i32) -> (i32, i32) {
    %c0_i32 = arith.constant 0 : i32
    %c0_i32_0 = arith.constant 0 : i32
    return %arg0, %c0_i32 : i32, i32
  }
  func.func @transform_1(%arg0: i32) -> (i32, i32) {
    %c0_i32 = arith.constant 0 : i32
    %c0_i32_0 = arith.constant 0 : i32
    %c0_i32_1 = arith.constant 0 : i32
    return %c0_i32, %c0_i32_0 : i32, i32
  }
  func.func @transform_2(%arg0: i32) -> (i32, i32) {
    %c0_i32 = arith.constant 0 : i32
    %c0_i32_0 = arith.constant 0 : i32
    %c0_i32_1 = arith.constant 0 : i32
    return %c0_i32, %c0_i32_0 : i32, i32
  }
  func.func @transform_3(%arg0: i32) -> (i32, i32) {
    %c0_i32 = arith.constant 0 : i32
    %c0_i32_0 = arith.constant 0 : i32
    %c0_i32_1 = arith.constant 0 : i32
    return %c0_i32, %c0_i32_0 : i32, i32
  }
  func.func @transform_4(%arg0: i32) -> (i32, i32) {
    %c0_i32 = arith.constant 0 : i32
    %c0_i32_0 = arith.constant 0 : i32
    %c0_i32_1 = arith.constant 0 : i32
    return %c0_i32, %c0_i32_0 : i32, i32
  }
  func.func @transform_5(%arg0: i32) -> (i32, i32) {
    %c0_i32 = arith.constant 0 : i32
    %c0_i32_0 = arith.constant 0 : i32
    return %arg0, %c0_i32 : i32, i32
  }
}

</mosaic_0001>

<llo_original>
// kernel: network_forward.1
$region0: #{network_forward.1}
  #allocation0 [shape = 'u32[]', space=smem, size = 0x4, offset = 0x4, fixed_abs, tag = 'smem constant byte address 0x4 - core index']
  #allocation1 [shape = 'u32[144,128]{1,0:T(1,128)}', space=vmem, size = 0x12000, scoped, tag = 'internal scratch']
  %s0 = inlined_call_operand.vmem [shape: f32[2,4], index: 0, kind: input, shape index: {}]
  %s1 = inlined_call_operand.vmem [shape: f32[4,128], index: 1, kind: input, shape index: {}]
  %s2 = inlined_call_operand.vmem [shape: f32[1,128], index: 2, kind: input, shape index: {}]
  %s3 = inlined_call_operand.vmem [shape: f32[128,3], index: 3, kind: input, shape index: {}]
  %s4 = inlined_call_operand.vmem [shape: f32[1,3], index: 4, kind: input, shape index: {}]
  %s5 = inlined_call_operand.hbm [shape: f32[2,3], index: 5, kind: output, shape index: {}]
  %s6 = sld [smem:[#allocation0]]
  $region30: #{network_forward.1} parent=0
    _
  %s8 = ssub.s32 1, %s6
  %s9 = scalar_select 0, %s8, %s6
  $region1: #{network_forward.1} parent=0
    #allocation2 [shape = 'u8[4096]{0}', space=vmem, size = 0x1000, scoped, tag = 'output window, operand 0, single buffered']
    #allocation3 [shape = 's32[1]{0}', space=sflag, size = 0x4, scoped, tag = 'scoped memory for network_forward.1']
    %10 = vsyncpa [#allocation3], 0
    // Predicated region
    $region2: #{network_forward.1} parent=1 // pred_check
      _
    $region3: #{network_forward.1} parent=1 // pred_check_branch
      %12 = sbr.rel (0) target = $region5
    $region4: #{network_forward.1} parent=1 // pred_region
      _
    $region5: #{network_forward.1} parent=1 // pred_fallthru
      _
    // Predicated region
    $region6: #{network_forward.1} parent=1 // pred_check
      _
    $region7: #{network_forward.1} parent=1 // pred_check_branch
      %14 = sbr.rel (0) target = $region9
    $region8: #{network_forward.1} parent=1 // pred_region
      _
    $region9: #{network_forward.1} parent=1 // pred_fallthru
      _
    // Predicated region
    $region10: #{network_forward.1} parent=1 // pred_check
      _
    $region11: #{network_forward.1} parent=1 // pred_check_branch
      %16 = sbr.rel (0) target = $region13
    $region12: #{network_forward.1} parent=1 // pred_region
      _
    $region13: #{network_forward.1} parent=1 // pred_fallthru
      _
    // Predicated region
    $region14: #{network_forward.1} parent=1 // pred_check
      _
    $region15: #{network_forward.1} parent=1 // pred_check_branch
      %18 = sbr.rel (0) target = $region17
    $region16: #{network_forward.1} parent=1 // pred_region
      _
    $region17: #{network_forward.1} parent=1 // pred_fallthru
      _
    // Predicated region
    $region18: #{network_forward.1} parent=1 // pred_check
      _
    $region19: #{network_forward.1} parent=1 // pred_check_branch
      %20 = sbr.rel (0) target = $region21
    $region20: #{network_forward.1} parent=1 // pred_region
      _
    $region21: #{network_forward.1} parent=1 // pred_fallthru
      _
    %v21 = vld [vmem:[%s0] sm:$0xff]
    %v22 = vld [vmem:[%s1] sm:$0xf]
    %v23 = vld [vmem:[%s2] sm:$0x1]
    %v25 = vlaneseq
    %v26 = vshrl.u32 %v25, 7
    %v27 = vsub.s32 0, %v26
    %v28 = vrot.slane %v23, %v27
    %vm30 = vcmask 31744
    %v32 = vsel %vm30, %v21, 0
    %vm34 = vcmask 1043456
    %v36 = vsel %vm34, %v22, 0
    %38 = vmatprep.subr.mxu0 0.0
    %39 = vmatpush1.msra.mxu0 0.0
    %40 = vmatprep.subr.mxu0 0.0
    %41 = vmatpush1.msra.mxu0 0.0
    %42 = vmatprep.subr.mxu0 0.0
    %43 = vmatpush1.msra.mxu0 0.0
    %44 = vmatprep.subr.mxu0 0.0
    %45 = vmatpush1.msra.mxu0 0.0
    %46 = vmatprep.subr.mxu0 0.0
    %47 = vmatpush1.msra.mxu0 0.0
    %48 = vmatprep.subr.mxu0 0.0
    %49 = vmatpush1.msra.mxu0 0.0
    %50 = vmatprep.subr.mxu0 0.0
    %51 = vmatpush1.msra.mxu0 0.0
    %52 = vmatprep.subr.mxu0 0.0
    %53 = vmatpush1.msra.mxu0 0.0
    %54 = vmatprep.subr.mxu0 0.0
    %55 = vmatpush1.msra.mxu0 0.0
    %56 = vmatprep.subr.mxu0 0.0
    %57 = vmatpush1.msra.mxu0 0.0
    %58 = vmatprep.subr.mxu0 0.0
    %59 = vmatpush1.msra.mxu0 0.0
    %60 = vmatprep.subr.mxu0 0.0
    %61 = vmatpush1.msra.mxu0 0.0
    %62 = vmatprep.subr.mxu0 0.0
    %63 = vmatpush1.msra.mxu0 0.0
    %64 = vmatprep.subr.mxu0 0.0
    %65 = vmatpush1.msra.mxu0 0.0
    %66 = vmatprep.subr.mxu0 0.0
    %67 = vmatpush1.msra.mxu0 0.0
    %68 = vmatprep.subr.mxu0 0.0
    %69 = vmatpush1.msra.mxu0 %v36
    %70 = vmatprep.subr.mxu0 0.0
    %71 = vmatpush2.msra.mxu0 0.0
    %72 = vmatprep.subr.mxu0 0.0
    %73 = vmatpush2.msra.mxu0 0.0
    %74 = vmatprep.subr.mxu0 0.0
    %75 = vmatpush2.msra.mxu0 0.0
    %76 = vmatprep.subr.mxu0 0.0
    %77 = vmatpush2.msra.mxu0 0.0
    %78 = vmatprep.subr.mxu0 0.0
    %79 = vmatpush2.msra.mxu0 0.0
    %80 = vmatprep.subr.mxu0 0.0
    %81 = vmatpush2.msra.mxu0 0.0
    %82 = vmatprep.subr.mxu0 0.0
    %83 = vmatpush2.msra.mxu0 0.0
    %84 = vmatprep.subr.mxu0 0.0
    %85 = vmatpush2.msra.mxu0 0.0
    %86 = vmatprep.subr.mxu0 0.0
    %87 = vmatpush2.msra.mxu0 0.0
    %88 = vmatprep.subr.mxu0 0.0
    %89 = vmatpush2.msra.mxu0 0.0
    %90 = vmatprep.subr.mxu0 0.0
    %91 = vmatpush2.msra.mxu0 0.0
    %92 = vmatprep.subr.mxu0 0.0
    %93 = vmatpush2.msra.mxu0 0.0
    %94 = vmatprep.subr.mxu0 0.0
    %95 = vmatpush2.msra.mxu0 0.0
    %96 = vmatprep.subr.mxu0 0.0
    %97 = vmatpush2.msra.mxu0 0.0
    %98 = vmatprep.subr.mxu0 0.0
    %99 = vmatpush2.msra.mxu0 0.0
    %100 = vmatprep.subr.mxu0 0.0
    %101 = vmatpush2.msra.mxu0 0.0
    %102 = vmatprep.mubr.f32.mxu0 0.0
    %103 = vmatmul.mubr.f32.gmra.mxu0 %v32
    %v104 = vpop.f32.mrf.mxu0
    %v105 = vadd.f32 %v28, %v104
    %v106 = vpop.f32.mrf.mxu0
    %107 = vdwg.mxu0
    %v108 = vmax.f32 %v105, 0.0
    %v109 = vld [vmem:[%s3] sm:$0xff]
    %v110 = vld [vmem:[%s3 + $0x8] sm:$0xff]
    %v111 = vld [vmem:[%s3 + $0x10] sm:$0xff]
    %v112 = vld [vmem:[%s3 + $0x18] sm:$0xff]
    %v113 = vld [vmem:[%s3 + $0x20] sm:$0xff]
    %v114 = vld [vmem:[%s3 + $0x28] sm:$0xff]
    %v115 = vld [vmem:[%s3 + $0x30] sm:$0xff]
    %v116 = vld [vmem:[%s3 + $0x38] sm:$0xff]
    %v117 = vld [vmem:[%s3 + $0x40] sm:$0xff]
    %v118 = vld [vmem:[%s3 + $0x48] sm:$0xff]
    %v119 = vld [vmem:[%s3 + $0x50] sm:$0xff]
    %v120 = vld [vmem:[%s3 + $0x58] sm:$0xff]
    %v121 = vld [vmem:[%s3 + $0x60] sm:$0xff]
    %v122 = vld [vmem:[%s3 + $0x68] sm:$0xff]
    %v123 = vld [vmem:[%s3 + $0x70] sm:$0xff]
    %v124 = vld [vmem:[%s3 + $0x78] sm:$0xff]
    %v125 = vld [vmem:[%s4] sm:$0x1]
    %v127 = vlaneseq
    %v128 = vshrl.u32 %v127, 7
    %v129 = vsub.s32 0, %v128
    %v130 = vrot.slane %v125, %v129
    %132 = vmatprep.subr.mxu0 0.0
    %133 = vmatpush1.msra.mxu0 %v124
    %134 = vmatprep.subr.mxu0 0.0
    %135 = vmatpush1.msra.mxu0 %v123
    %136 = vmatprep.subr.mxu0 0.0
    %137 = vmatpush1.msra.mxu0 %v122
    %138 = vmatprep.subr.mxu0 0.0
    %139 = vmatpush1.msra.mxu0 %v121
    %140 = vmatprep.subr.mxu0 0.0
    %141 = vmatpush1.msra.mxu0 %v120
    %142 = vmatprep.subr.mxu0 0.0
    %143 = vmatpush1.msra.mxu0 %v119
    %144 = vmatprep.subr.mxu0 0.0
    %145 = vmatpush1.msra.mxu0 %v118
    %146 = vmatprep.subr.mxu0 0.0
    %147 = vmatpush1.msra.mxu0 %v117
    %148 = vmatprep.subr.mxu0 0.0
    %149 = vmatpush1.msra.mxu0 %v116
    %150 = vmatprep.subr.mxu0 0.0
    %151 = vmatpush1.msra.mxu0 %v115
    %152 = vmatprep.subr.mxu0 0.0
    %153 = vmatpush1.msra.mxu0 %v114
    %154 = vmatprep.subr.mxu0 0.0
    %155 = vmatpush1.msra.mxu0 %v113
    %156 = vmatprep.subr.mxu0 0.0
    %157 = vmatpush1.msra.mxu0 %v112
    %158 = vmatprep.subr.mxu0 0.0
    %159 = vmatpush1.msra.mxu0 %v111
    %160 = vmatprep.subr.mxu0 0.0
    %161 = vmatpush1.msra.mxu0 %v110
    %162 = vmatprep.subr.mxu0 0.0
    %163 = vmatpush1.msra.mxu0 %v109
    %164 = vmatprep.subr.mxu0 0.0
    %165 = vmatpush2.msra.mxu0 0.0
    %166 = vmatprep.subr.mxu0 0.0
    %167 = vmatpush2.msra.mxu0 0.0
    %168 = vmatprep.subr.mxu0 0.0
    %169 = vmatpush2.msra.mxu0 0.0
    %170 = vmatprep.subr.mxu0 0.0
    %171 = vmatpush2.msra.mxu0 0.0
    %172 = vmatprep.subr.mxu0 0.0
    %173 = vmatpush2.msra.mxu0 0.0
    %174 = vmatprep.subr.mxu0 0.0
    %175 = vmatpush2.msra.mxu0 0.0
    %176 = vmatprep.subr.mxu0 0.0
    %177 = vmatpush2.msra.mxu0 0.0
    %178 = vmatprep.subr.mxu0 0.0
    %179 = vmatpush2.msra.mxu0 0.0
    %180 = vmatprep.subr.mxu0 0.0
    %181 = vmatpush2.msra.mxu0 0.0
    %182 = vmatprep.subr.mxu0 0.0
    %183 = vmatpush2.msra.mxu0 0.0
    %184 = vmatprep.subr.mxu0 0.0
    %185 = vmatpush2.msra.mxu0 0.0
    %186 = vmatprep.subr.mxu0 0.0
    %187 = vmatpush2.msra.mxu0 0.0
    %188 = vmatprep.subr.mxu0 0.0
    %189 = vmatpush2.msra.mxu0 0.0
    %190 = vmatprep.subr.mxu0 0.0
    %191 = vmatpush2.msra.mxu0 0.0
    %192 = vmatprep.subr.mxu0 0.0
    %193 = vmatpush2.msra.mxu0 0.0
    %194 = vmatprep.subr.mxu0 0.0
    %195 = vmatpush2.msra.mxu0 0.0
    %196 = vmatprep.mubr.f32.mxu0 0.0
    %197 = vmatmul.mubr.f32.gmra.mxu0 %v108
    %v198 = vpop.f32.mrf.mxu0
    %v199 = vadd.f32 %v130, %v198
    %v200 = vpop.f32.mrf.mxu0
    %201 = vdwg.mxu0
    %vm202 = vcmask 23552
    %203 = vst.msk [vmem:[#allocation2] sm:$0xff] %vm202, %v199
    // Predicated region
    $region22: #{network_forward.1} parent=1 // pred_check
      _
    $region23: #{network_forward.1} parent=1 // pred_check_branch
      %205 = sbr.rel (0) target = $region25
    $region24: #{network_forward.1} parent=1 // pred_region
      %s207 = ssub.s32 128, 32
      %208 = vsyncadd [#allocation3], %s207
      %s209 = sshll.u32 [#allocation2], 4
      %s210 = int_to_ptr.vmem [resolvable:$true] %s209
      %215 = dma.vmem_to_hbm [thread:$0]  %s210, 32, %s5, [#allocation3], 32, 32, 2
    $region25: #{network_forward.1} parent=1 // pred_fallthru
      _
    // Predicated region
    $region26: #{network_forward.1} parent=1 // pred_check
      _
    $region27: #{network_forward.1} parent=1 // pred_check_branch
      %217 = sbr.rel (0) target = $region29
    $region28: #{network_forward.1} parent=1 // pred_region
      %218 = dma.done [#allocation3], 128
    $region29: #{network_forward.1} parent=1 // pred_fallthru
      _
    %219 = vsyncpa [#allocation3], 1

</llo_original>
